<compile_context>
chip_gen: v6e
topology: v6e:2x2x1
jax: 0.10.0
libtpu: 0.0.40
codegen_flags: <defaults>
</compile_context>

<pallas_src>
import numpy as np
import jax
import jax.numpy as jnp
from jax import lax
from jax.experimental import pallas as pl
from jax.experimental.pallas import tpu as pltpu


def _encoder_kernel(x_ref, w1b_ref, b1_ref, w2b_ref, b2_ref, out_ref):
    # x_ref  : (nb, Ho, 2*W*Cin)   row-pair input (image rows 2yo, 2yo+1)
    # w1b_ref: (4*W*Cin,  2*W*Cout)  banded conv1 weights
    # b1_ref : (1, 2*W*Cout)
    # w2b_ref: (4*W*Cout, 2*W*Cout)  banded conv2 weights, output columns
    #          permuted as [row0 even-x | row0 odd-x | row1 even-x | row1 odd-x]
    # b2_ref : (1, 2*W*Cout)
    # out_ref: (nb, Ho, Wo*Cout)
    nb, Ho, two_wci = x_ref.shape
    wci = two_wci // 2                      # W*Cin
    wco = w1b_ref.shape[1] // 2             # W*Cout
    woc = wco // 2                          # Wo*Cout
    M = nb * Ho
    f32 = jnp.float32

    # ---- conv1: build the 4-row quad (rows 2yo-1 .. 2yo+2) and one matmul ----
    xv = x_ref[...]                                              # (nb, Ho, 2*wci)
    zx = jnp.zeros((nb, 1, wci), f32)
    prev = jnp.concatenate([zx, xv[:, :Ho - 1, wci:]], axis=1)   # row 2yo-1 (zero-padded)
    nxt = jnp.concatenate([xv[:, 1:, :wci], zx], axis=1)         # row 2yo+2 (zero-padded)
    xin = jnp.concatenate([prev, xv, nxt], axis=2).reshape(M, 4 * wci)

    y1 = jnp.dot(xin, w1b_ref[...], preferred_element_type=f32) + b1_ref[...]
    # y1 columns: (row-in-pair, x, cout) -> (M, 2*wco), lane-dense.

    # ---- conv2: same quad construction on conv1's output, one matmul --------
    y1v = y1.reshape(nb, Ho, 2 * wco)
    zy = jnp.zeros((nb, 1, wco), f32)
    prev2 = jnp.concatenate([zy, y1v[:, :Ho - 1, wco:]], axis=1)
    nxt2 = jnp.concatenate([y1v[:, 1:, :wco], zy], axis=1)
    zin = jnp.concatenate([prev2, y1v, nxt2], axis=2).reshape(M, 4 * wco)

    y2 = jnp.dot(zin, w2b_ref[...], preferred_element_type=f32) + b2_ref[...]
    y2 = jnp.maximum(y2, 0.0)                                    # fused ReLU
    # y2 columns (permuted): [r0 even | r0 odd | r1 even | r1 odd], each woc wide.

    # ---- MaxPool2d(2,2): three maxes of contiguous 64-lane register slices ---
    r0 = jnp.maximum(y2[:, 0:woc], y2[:, woc:2 * woc])           # row 2yo   W-pairs
    r1 = jnp.maximum(y2[:, 2 * woc:3 * woc], y2[:, 3 * woc:])    # row 2yo+1 W-pairs
    pooled = jnp.maximum(r0, r1)                                 # (M, Wo*Cout)

    out_ref[...] = pooled.reshape(nb, Ho, woc).astype(out_ref.dtype)


def _banded_conv_weights(w, width, split_even_odd):
    """Fold a 3x3 / stride-1 / pad-1 conv into a banded matmul on row pairs.

    w: (Cout, Cin, 3, 3) OIHW.  Returns B of shape (4*width*Cin, 2*width*Cout)
    such that for an input row vector laid out as (yi, x, cin) with yi indexing
    image rows [2yo-1, 2yo, 2yo+1, 2yo+2] (out-of-image rows zero-filled),
    in_vec @ B gives conv output rows [2yo, 2yo+1] laid out as (row, x, cout)
    (or (row, x-parity, x//2, cout) if split_even_odd, which lets the caller
    do the 2x2 max-pool with contiguous lane slices).
    """
    cout, cin, kh, kw = w.shape
    assert kh == 3 and kw == 3
    yi = np.arange(4)[:, None, None]
    yl = np.arange(2)[None, :, None]
    dy = np.arange(3)[None, None, :]
    ind_y = (yi == yl + dy).astype(np.float32)                   # (4, 2, 3)
    xi = np.arange(width)[:, None, None]
    xo = np.arange(width)[None, :, None]
    dx = np.arange(3)[None, None, :]
    ind_x = (xi == xo + dx - 1).astype(np.float32)               # (W, W, 3); x-padding = missing entries
    b6 = jnp.einsum('abd,efg,ocdg->aecbfo',
                    jnp.asarray(ind_y), jnp.asarray(ind_x), w.astype(jnp.float32))
    # b6: (4, W, Cin, 2, W, Cout)
    if split_even_odd:
        b6 = b6.reshape(4, width, cin, 2, width // 2, 2, cout)   # xo -> (xh, parity)
        b6 = jnp.transpose(b6, (0, 1, 2, 3, 5, 4, 6))            # -> (.., parity, xh, cout)
    return b6.reshape(4 * width * cin, 2 * width * cout)


def encoder_layer_forward(x_nchw, w1, b1, w2, b2):
    """x_nchw: (N, Cin, H, W); w: (Cout, Cin, 3, 3) PyTorch OIHW layout."""
    N, Cin, H, W = x_nchw.shape
    Cout = w1.shape[0]
    assert H % 2 == 0 and W % 2 == 0, "even H/W assumed (2x2 stride-2 pool)"
    Ho, Wo = H // 2, W // 2

    # Batch fold: keep the grid >= 2 steps when N > 1 (so v7x's two TensorCores
    # both get work) with a modest VMEM cap.  Raise the cap on v6e if desired.
    cap = max(1, min(N // 2 if N > 1 else 1, 32))
    nb = 1
    for d in range(cap, 0, -1):
        if N % d == 0:
            nb = d
            break

    # Layout glue: a single HBM relayout (replaces the former transpose + pad).
    xr = jnp.transpose(x_nchw, (0, 2, 3, 1)).reshape(N, Ho, 2 * W * Cin)

    w1b = _banded_conv_weights(w1, W, split_even_odd=False)      # (4*W*Cin,  2*W*Cout)
    w2b = _banded_conv_weights(w2, W, split_even_odd=True)       # (4*W*Cout, 2*W*Cout)
    b1r = jnp.tile(b1.astype(jnp.float32), 2 * W).reshape(1, 2 * W * Cout)
    b2r = jnp.tile(b2.astype(jnp.float32), 2 * W).reshape(1, 2 * W * Cout)

    out = pl.pallas_call(
        _encoder_kernel,
        out_shape=jax.ShapeDtypeStruct((N, Ho, Wo * Cout), x_nchw.dtype),
        grid_spec=pltpu.PrefetchScalarGridSpec(
            num_scalar_prefetch=0,
            grid=(N // nb,),
            in_specs=[
                pl.BlockSpec((nb, Ho, 2 * W * Cin), lambda b: (b, 0, 0)),
                pl.BlockSpec((4 * W * Cin, 2 * W * Cout), lambda b: (0, 0)),
                pl.BlockSpec((1, 2 * W * Cout), lambda b: (0, 0)),
                pl.BlockSpec((4 * W * Cout, 2 * W * Cout), lambda b: (0, 0)),
                pl.BlockSpec((1, 2 * W * Cout), lambda b: (0, 0)),
            ],
            out_specs=pl.BlockSpec((nb, Ho, Wo * Cout), lambda b: (b, 0, 0)),
        ),
        compiler_params=pltpu.CompilerParams(
            dimension_semantics=("parallel",)),   # batch blocks are independent
    )(xr, w1b, b1r, w2b, b2r)

    out = out.reshape(N, Ho, Wo, Cout)
    return jnp.transpose(out, (0, 3, 1, 2))      # back to NCHW


def ref_forward(x, w1, b1, w2, b2):
    """Pure-JAX reference matching the PyTorch forward (NCHW)."""
    dn = ("NCHW", "OIHW", "NCHW")
    y = lax.conv_general_dilated(x, w1, (1, 1), ((1, 1), (1, 1)),
                                 dimension_numbers=dn) + b1[None, :, None, None]
    y = lax.conv_general_dilated(y, w2, (1, 1), ((1, 1), (1, 1)),
                                 dimension_numbers=dn) + b2[None, :, None, None]
    y = jnp.maximum(y, 0.0)
    y = lax.reduce_window(y, -jnp.inf, lax.max,
                          (1, 1, 2, 2), (1, 1, 2, 2), "VALID")
    return y


if __name__ == "__main__":
    N, Cin, H, W, Cout = 2, 4, 16, 16, 8

    key = jax.random.PRNGKey(0)
    kx, kw1, kb1, kw2, kb2 = jax.random.split(key, 5)

    x = jax.random.normal(kx, (N, Cin, H, W), jnp.float32)

    # Deterministic PyTorch-style Conv2d init: U(-1/sqrt(fan_in), 1/sqrt(fan_in))
    bound1 = 1.0 / (Cin * 9) ** 0.5
    w1 = jax.random.uniform(kw1, (Cout, Cin, 3, 3), jnp.float32, -bound1, bound1)
    b1 = jax.random.uniform(kb1, (Cout,), jnp.float32, -bound1, bound1)
    bound2 = 1.0 / (Cout * 9) ** 0.5
    w2 = jax.random.uniform(kw2, (Cout, Cout, 3, 3), jnp.float32, -bound2, bound2)
    b2 = jax.random.uniform(kb2, (Cout,), jnp.float32, -bound2, bound2)

    out = encoder_layer_forward(x, w1, b1, w2, b2)
    out = jax.block_until_ready(out)

    ref = ref_forward(x, w1, b1, w2, b2)
    assert out.shape == ref.shape == (N, Cout, H // 2, W // 2), (out.shape, ref.shape)
    max_err = float(jnp.max(jnp.abs(out - ref)))
    assert max_err < 1e-2, f"max abs error too large: {max_err}"

    print("KERNEL_OK")
</pallas_src>

<mosaic_0001>
module attributes {stable_mosaic.version = 11 : i64} {
  func.func @_encoder_kernel(%arg0: i32, %arg1: memref<1x8x128xf32, #tpu.memory_space<vmem>>, %arg2: memref<256x256xf32, #tpu.memory_space<vmem>>, %arg3: memref<1x256xf32, #tpu.memory_space<vmem>>, %arg4: memref<512x256xf32, #tpu.memory_space<vmem>>, %arg5: memref<1x256xf32, #tpu.memory_space<vmem>>, %arg6: memref<1x8x64xf32, #tpu.memory_space<vmem>>) attributes {dimension_semantics = [#tpu.dimension_semantics<parallel>], iteration_bounds = array<i64: 2>, scalar_prefetch = 0 : i64, scratch_operands = 0 : i64, tpu.core_type = #tpu.core_type<tc>, window_params = [{transform_indices = @transform_0, window_bounds = array<i64: 1, 8, 128>}, {pipeline_mode = #tpu.pipeline_mode<synchronous>, transform_indices = @transform_1, window_bounds = array<i64: 256, 256>}, {pipeline_mode = #tpu.pipeline_mode<synchronous>, transform_indices = @transform_2, window_bounds = array<i64: 1, 256>}, {pipeline_mode = #tpu.pipeline_mode<synchronous>, transform_indices = @transform_3, window_bounds = array<i64: 512, 256>}, {pipeline_mode = #tpu.pipeline_mode<synchronous>, transform_indices = @transform_4, window_bounds = array<i64: 1, 256>}, {transform_indices = @transform_5, window_bounds = array<i64: 1, 8, 64>}]} {
    %c0 = arith.constant 0 : index
    %c0_0 = arith.constant 0 : index
    %c0_1 = arith.constant 0 : index
    %0 = vector.load %arg1[%c0, %c0_0, %c0_1] : memref<1x8x128xf32, #tpu.memory_space<vmem>>, vector<1x8x128xf32>
    %cst = arith.constant 0.000000e+00 : f32
    %1 = vector.broadcast %cst : f32 to vector<1x1x64xf32>
    %2 = vector.extract_strided_slice %0 {offsets = [0, 0, 64], sizes = [1, 7, 64], strides = [1, 1, 1]} : vector<1x8x128xf32> to vector<1x7x64xf32>
    %3 = tpu.concatenate %1, %2 in 1 : vector<1x1x64xf32>, vector<1x7x64xf32> -> vector<1x8x64xf32>
    %4 = vector.extract_strided_slice %0 {offsets = [0, 1, 0], sizes = [1, 7, 64], strides = [1, 1, 1]} : vector<1x8x128xf32> to vector<1x7x64xf32>
    %5 = tpu.concatenate %4, %1 in 1 : vector<1x7x64xf32>, vector<1x1x64xf32> -> vector<1x8x64xf32>
    %6 = tpu.concatenate %3, %0, %5 in 2 : vector<1x8x64xf32>, vector<1x8x128xf32>, vector<1x8x64xf32> -> vector<1x8x256xf32>
    %7 = vector.shape_cast %6 : vector<1x8x256xf32> to vector<8x256xf32>
    %c0_2 = arith.constant 0 : index
    %c0_3 = arith.constant 0 : index
    %8 = vector.load %arg2[%c0_2, %c0_3] : memref<256x256xf32, #tpu.memory_space<vmem>>, vector<256x256xf32>
    %cst_4 = arith.constant dense<0.000000e+00> : vector<8x256xf32>
    %9 = tpu.matmul %7, %8, %cst_4 {dimension_numbers = #tpu.dot_dimension_numbers<[1], [0], [0], [1], [0, 0, 1, 1], [], []>} : vector<8x256xf32>, vector<256x256xf32>, vector<8x256xf32> -> vector<8x256xf32>
    %c0_5 = arith.constant 0 : index
    %c0_6 = arith.constant 0 : index
    %10 = vector.load %arg3[%c0_5, %c0_6] : memref<1x256xf32, #tpu.memory_space<vmem>>, vector<1x256xf32>
    %11 = vector.broadcast %10 : vector<1x256xf32> to vector<8x256xf32>
    %12 = arith.addf %9, %11 : vector<8x256xf32>
    %13 = vector.shape_cast %12 : vector<8x256xf32> to vector<1x8x256xf32>
    %cst_7 = arith.constant 0.000000e+00 : f32
    %14 = vector.broadcast %cst_7 : f32 to vector<1x1x128xf32>
    %15 = vector.extract_strided_slice %13 {offsets = [0, 0, 128], sizes = [1, 7, 128], strides = [1, 1, 1]} : vector<1x8x256xf32> to vector<1x7x128xf32>
    %16 = tpu.concatenate %14, %15 in 1 : vector<1x1x128xf32>, vector<1x7x128xf32> -> vector<1x8x128xf32>
    %17 = vector.extract_strided_slice %13 {offsets = [0, 1, 0], sizes = [1, 7, 128], strides = [1, 1, 1]} : vector<1x8x256xf32> to vector<1x7x128xf32>
    %18 = tpu.concatenate %17, %14 in 1 : vector<1x7x128xf32>, vector<1x1x128xf32> -> vector<1x8x128xf32>
    %19 = tpu.concatenate %16, %13, %18 in 2 : vector<1x8x128xf32>, vector<1x8x256xf32>, vector<1x8x128xf32> -> vector<1x8x512xf32>
    %20 = vector.shape_cast %19 : vector<1x8x512xf32> to vector<8x512xf32>
    %c0_8 = arith.constant 0 : index
    %c0_9 = arith.constant 0 : index
    %21 = vector.load %arg4[%c0_8, %c0_9] : memref<512x256xf32, #tpu.memory_space<vmem>>, vector<512x256xf32>
    %cst_10 = arith.constant dense<0.000000e+00> : vector<8x256xf32>
    %22 = tpu.matmul %20, %21, %cst_10 {dimension_numbers = #tpu.dot_dimension_numbers<[1], [0], [0], [1], [0, 0, 1, 1], [], []>} : vector<8x512xf32>, vector<512x256xf32>, vector<8x256xf32> -> vector<8x256xf32>
    %c0_11 = arith.constant 0 : index
    %c0_12 = arith.constant 0 : index
    %23 = vector.load %arg5[%c0_11, %c0_12] : memref<1x256xf32, #tpu.memory_space<vmem>>, vector<1x256xf32>
    %24 = vector.broadcast %23 : vector<1x256xf32> to vector<8x256xf32>
    %25 = arith.addf %22, %24 : vector<8x256xf32>
    %cst_13 = arith.constant 0.000000e+00 : f32
    %26 = vector.broadcast %cst_13 : f32 to vector<8x256xf32>
    %27 = arith.maximumf %25, %26 : vector<8x256xf32>
    %28 = vector.extract_strided_slice %27 {offsets = [0, 0], sizes = [8, 64], strides = [1, 1]} : vector<8x256xf32> to vector<8x64xf32>
    %29 = vector.extract_strided_slice %27 {offsets = [0, 64], sizes = [8, 64], strides = [1, 1]} : vector<8x256xf32> to vector<8x64xf32>
    %30 = arith.maximumf %28, %29 : vector<8x64xf32>
    %31 = vector.extract_strided_slice %27 {offsets = [0, 128], sizes = [8, 64], strides = [1, 1]} : vector<8x256xf32> to vector<8x64xf32>
    %32 = vector.extract_strided_slice %27 {offsets = [0, 192], sizes = [8, 64], strides = [1, 1]} : vector<8x256xf32> to vector<8x64xf32>
    %33 = arith.maximumf %31, %32 : vector<8x64xf32>
    %34 = arith.maximumf %30, %33 : vector<8x64xf32>
    %35 = vector.shape_cast %34 : vector<8x64xf32> to vector<1x8x64xf32>
    %c0_14 = arith.constant 0 : index
    %c0_15 = arith.constant 0 : index
    %c0_16 = arith.constant 0 : index
    %36 = vector.load %arg6[%c0_14, %c0_15, %c0_16] : memref<1x8x64xf32, #tpu.memory_space<vmem>>, vector<1x8x64xf32>
    tpu.vector_store %arg6[%c0_14, %c0_15, %c0_16], %35 {strides = array<i32>} : memref<1x8x64xf32, #tpu.memory_space<vmem>>, vector<1x8x64xf32>,
    return
  }
  func.func @transform_0(%arg0: i32) -> (i32, i32, i32) {
    %c0_i32 = arith.constant 0 : i32
    %c0_i32_0 = arith.constant 0 : i32
    %c0_i32_1 = arith.constant 0 : i32
    return %arg0, %c0_i32, %c0_i32_0 : i32, i32, i32
  }
  func.func @transform_1(%arg0: i32) -> (i32, i32) {
    %c0_i32 = arith.constant 0 : i32
    %c0_i32_0 = arith.constant 0 : i32
    %c0_i32_1 = arith.constant 0 : i32
    return %c0_i32, %c0_i32_0 : i32, i32
  }
  func.func @transform_2(%arg0: i32) -> (i32, i32) {
    %c0_i32 = arith.constant 0 : i32
    %c0_i32_0 = arith.constant 0 : i32
    %c0_i32_1 = arith.constant 0 : i32
    return %c0_i32, %c0_i32_0 : i32, i32
  }
  func.func @transform_3(%arg0: i32) -> (i32, i32) {
    %c0_i32 = arith.constant 0 : i32
    %c0_i32_0 = arith.constant 0 : i32
    %c0_i32_1 = arith.constant 0 : i32
    return %c0_i32, %c0_i32_0 : i32, i32
  }
  func.func @transform_4(%arg0: i32) -> (i32, i32) {
    %c0_i32 = arith.constant 0 : i32
    %c0_i32_0 = arith.constant 0 : i32
    %c0_i32_1 = arith.constant 0 : i32
    return %c0_i32, %c0_i32_0 : i32, i32
  }
  func.func @transform_5(%arg0: i32) -> (i32, i32, i32) {
    %c0_i32 = arith.constant 0 : i32
    %c0_i32_0 = arith.constant 0 : i32
    %c0_i32_1 = arith.constant 0 : i32
    return %arg0, %c0_i32, %c0_i32_0 : i32, i32, i32
  }
}

</mosaic_0001>

<llo_original>
// kernel: tpu_custom_call.1
$region0: #{tpu_custom_call.1}
  #allocation0 [shape = 'u32[]', space=smem, size = 0x4, offset = 0x4, fixed_abs, tag = 'smem constant byte address 0x4 - core index']
  #allocation1 [shape = 'u32[144,128]{1,0:T(1,128)}', space=vmem, size = 0x12000, scoped, tag = 'internal scratch']
  %s0 = inlined_call_operand.hbm [shape: f32[2,8,128], index: 0, kind: input, shape index: {}]
  %s1 = inlined_call_operand.hbm [shape: f32[256,256], index: 1, kind: input, shape index: {}]
  %s2 = inlined_call_operand.vmem [shape: f32[1,256], index: 2, kind: input, shape index: {}]
  %s3 = inlined_call_operand.hbm [shape: f32[512,256], index: 3, kind: input, shape index: {}]
  %s4 = inlined_call_operand.vmem [shape: f32[1,256], index: 4, kind: input, shape index: {}]
  %s5 = inlined_call_operand.hbm [shape: f32[2,8,64], index: 5, kind: output, shape index: {}]
  %s6 = sld [smem:[#allocation0]]
  $region65: #{tpu_custom_call.1} parent=0
    _
  %s8 = ssub.s32 1, %s6
  %s9 = scalar_select 0, %s8, %s6
  $region1: #{tpu_custom_call.1} parent=0
    #allocation2 [shape = 'u8[8192]{0}', space=vmem, size = 0x2000, scoped, tag = 'input window, operand 0']
    #allocation3 [shape = 's32[2]{0}', space=sflag, size = 0x8, scoped, tag = 'scoped memory for tpu_custom_call.1']
    #allocation4 [shape = 's32[2]{0}', space=sflag, size = 0x8, scoped, tag = 'scoped memory for tpu_custom_call.1']
    #allocation5 [shape = 'u8[262144]{0}', space=vmem, size = 0x40000, scoped, tag = 'input window, operand 1, single buffered']
    #allocation6 [shape = 's32[1]{0}', space=sflag, size = 0x4, scoped, tag = 'scoped memory for tpu_custom_call.1']
    #allocation7 [shape = 'u8[524288]{0}', space=vmem, size = 0x80000, scoped, tag = 'input window, operand 3, single buffered']
    #allocation8 [shape = 'u8[8192]{0}', space=vmem, size = 0x2000, scoped, tag = 'output window, operand 0']
    %10 = vsyncpa [#allocation3], 0
    %s11 = scalar_lea.sflag [#allocation3], 1
    %12 = vsyncpa %s11, 0
    %13 = vsyncpa [#allocation6], 0
    %14 = vsyncpa [#allocation4], 0
    %s15 = scalar_lea.sflag [#allocation4], 1
    %16 = vsyncpa %s15, 0
    loop: start=0, step=1, limit=4
    $region2: #{tpu_custom_call.1} parent=1 // loop_pre_header
      _
    $region3: #{tpu_custom_call.1} parent=1 // loop_header
      %s18 = sphi 0, %s22
      %p19 = scmp.ge.s32.totalorder %s18, 4
      %s28 = sphi 0, %s30
      %s31 = sphi 0, %s28
      %s32 = sphi 0, %s31
      %s48 = sphi 0, %s32
      %s52 = sphi 0, %s52
      %s54 = sphi 0, %s52
      %s55 = sphi 0, %s54
      %s69 = sphi 0, %s55
      %s73 = sphi 0, %s73
      %s75 = sphi 0, %s73
      %s76 = sphi 0, %s75
      %s90 = sphi 0, %s76
      %s94 = sphi 0, %s94
      %s96 = sphi 0, %s94
      %s97 = sphi 0, %s96
      %s111 = sphi 0, %s97
      %s115 = sphi 0, %s115
      %s117 = sphi 0, %s115
      %s118 = sphi 0, %s117
      %s132 = sphi 0, %s118
      %s138 = sphi 0, %s140
      %s141 = sphi 0, %s138
      %s142 = sphi 0, %s141
      %s158 = sphi 0, %s142
    $region4: #{tpu_custom_call.1} parent=1 // loop_header_branch
      %21 = sbr.rel (%p19) target = $region8
    $region5: #{tpu_custom_call.1} parent=1 // loop_body
      %s23 = ssub.s32 %s18, 1
      %s24 = ssub.s32 %s18, 2
      %s25 = sadd.s32 %s18, 1
      %s26 = ssub.s32 %s18, %s25
      %p27 = scmp.eq.s32.totalorder %s26, 0
      %s29 = sadd.s32 %s28, 1
      %s30 = scalar_select %p27, %s28, %s29
      %p33 = pneg %p27
      %p34 = scmp.eq.s32.totalorder %s18, 1
      %p35 = por %p33, %p34
      %p36 = scmp.ne.s32.totalorder %s28, %s31
      %p37 = scmp.eq.s32.totalorder %s18, 0
      %p38 = por %p36, %p37
      %p39 = scmp.ne.s32.totalorder %s28, %s31
      %p40 = scmp.eq.s32.totalorder %s23, 1
      %p41 = por %p39, %p40
      %p42 = scmp.ne.s32.totalorder %s31, %s32
      %p43 = scmp.eq.s32.totalorder %s23, 0
      %p44 = por %p42, %p43
      %p45 = scmp.ne.s32.totalorder %s31, %s32
      %p46 = scmp.eq.s32.totalorder %s24, 1
      %p47 = por %p45, %p46
      %p49 = scmp.ne.s32.totalorder %s32, %s48
      %p50 = scmp.eq.s32.totalorder %s24, 0
      %p51 = por %p49, %p50
      %s53 = sadd.s32 %s52, 1
      %p56 = scmp.eq.s32.totalorder %s18, 1
      %p57 = scmp.ne.s32.totalorder %s52, %s54
      %p58 = scmp.eq.s32.totalorder %s18, 0
      %p59 = por %p57, %p58
      %p60 = scmp.ne.s32.totalorder %s52, %s54
      %p61 = scmp.eq.s32.totalorder %s23, 1
      %p62 = por %p60, %p61
      %p63 = scmp.ne.s32.totalorder %s54, %s55
      %p64 = scmp.eq.s32.totalorder %s23, 0
      %p65 = por %p63, %p64
      %p66 = scmp.ne.s32.totalorder %s54, %s55
      %p67 = scmp.eq.s32.totalorder %s24, 1
      %p68 = por %p66, %p67
      %p70 = scmp.ne.s32.totalorder %s55, %s69
      %p71 = scmp.eq.s32.totalorder %s24, 0
      %p72 = por %p70, %p71
      %s74 = sadd.s32 %s73, 1
      %p77 = scmp.eq.s32.totalorder %s18, 1
      %p78 = scmp.ne.s32.totalorder %s73, %s75
      %p79 = scmp.eq.s32.totalorder %s18, 0
      %p80 = por %p78, %p79
      %p81 = scmp.ne.s32.totalorder %s73, %s75
      %p82 = scmp.eq.s32.totalorder %s23, 1
      %p83 = por %p81, %p82
      %p84 = scmp.ne.s32.totalorder %s75, %s76
      %p85 = scmp.eq.s32.totalorder %s23, 0
      %p86 = por %p84, %p85
      %p87 = scmp.ne.s32.totalorder %s75, %s76
      %p88 = scmp.eq.s32.totalorder %s24, 1
      %p89 = por %p87, %p88
      %p91 = scmp.ne.s32.totalorder %s76, %s90
      %p92 = scmp.eq.s32.totalorder %s24, 0
      %p93 = por %p91, %p92
      %s95 = sadd.s32 %s94, 1
      %p98 = scmp.eq.s32.totalorder %s18, 1
      %p99 = scmp.ne.s32.totalorder %s94, %s96
      %p100 = scmp.eq.s32.totalorder %s18, 0
      %p101 = por %p99, %p100
      %p102 = scmp.ne.s32.totalorder %s94, %s96
      %p103 = scmp.eq.s32.totalorder %s23, 1
      %p104 = por %p102, %p103
      %p105 = scmp.ne.s32.totalorder %s96, %s97
      %p106 = scmp.eq.s32.totalorder %s23, 0
      %p107 = por %p105, %p106
      %p108 = scmp.ne.s32.totalorder %s96, %s97
      %p109 = scmp.eq.s32.totalorder %s24, 1
      %p110 = por %p108, %p109
      %p112 = scmp.ne.s32.totalorder %s97, %s111
      %p113 = scmp.eq.s32.totalorder %s24, 0
      %p114 = por %p112, %p113
      %s116 = sadd.s32 %s115, 1
      %p119 = scmp.eq.s32.totalorder %s18, 1
      %p120 = scmp.ne.s32.totalorder %s115, %s117
      %p121 = scmp.eq.s32.totalorder %s18, 0
      %p122 = por %p120, %p121
      %p123 = scmp.ne.s32.totalorder %s115, %s117
      %p124 = scmp.eq.s32.totalorder %s23, 1
      %p125 = por %p123, %p124
      %p126 = scmp.ne.s32.totalorder %s117, %s118
      %p127 = scmp.eq.s32.totalorder %s23, 0
      %p128 = por %p126, %p127
      %p129 = scmp.ne.s32.totalorder %s117, %s118
      %p130 = scmp.eq.s32.totalorder %s24, 1
      %p131 = por %p129, %p130
      %p133 = scmp.ne.s32.totalorder %s118, %s132
      %p134 = scmp.eq.s32.totalorder %s24, 0
      %p135 = por %p133, %p134
      %s136 = ssub.s32 %s18, %s25
      %p137 = scmp.eq.s32.totalorder %s136, 0
      %s139 = sadd.s32 %s138, 1
      %s140 = scalar_select %p137, %s138, %s139
      %p143 = pneg %p137
      %p144 = scmp.eq.s32.totalorder %s18, 1
      %p145 = por %p143, %p144
      %p146 = scmp.ne.s32.totalorder %s138, %s141
      %p147 = scmp.eq.s32.totalorder %s18, 0
      %p148 = por %p146, %p147
      %p149 = scmp.ne.s32.totalorder %s138, %s141
      %p150 = scmp.eq.s32.totalorder %s23, 1
      %p151 = por %p149, %p150
      %p152 = scmp.ne.s32.totalorder %s141, %s142
      %p153 = scmp.eq.s32.totalorder %s23, 0
      %p154 = por %p152, %p153
      %p155 = scmp.ne.s32.totalorder %s141, %s142
      %p156 = scmp.eq.s32.totalorder %s24, 1
      %p157 = por %p155, %p156
      %p159 = scmp.ne.s32.totalorder %s142, %s158
      %p160 = scmp.eq.s32.totalorder %s24, 0
      %p161 = por %p159, %p160
      %p162 = scmp.le.s32.totalorder 1, %s18
      %p163 = scmp.lt.s32.totalorder %s18, 3
      %p164 = pnand %p162, %p163
      %p165 = pneg %p164
      // Predicated region
      $region9: #{tpu_custom_call.1} parent=5 // pred_check
        _
      $region10: #{tpu_custom_call.1} parent=5 // pred_check_branch
        %167 = sbr.rel (%p164) target = $region12
      $region11: #{tpu_custom_call.1} parent=5 // pred_region
        %s168 = ssub.s32 %s18, 1
        // Predicated region
        $region13: #{tpu_custom_call.1} parent=11 // pred_check
          %p169 = pneg %p65
        $region14: #{tpu_custom_call.1} parent=11 // pred_check_branch
          %171 = sbr.rel (%p169) target = $region16
        $region15: #{tpu_custom_call.1} parent=11 // pred_region
          %s173 = ssub.s32 8192, 8192
          %174 = vsyncadd [#allocation6], %s173
          %s175 = sshll.u32 [#allocation5], 4
          %s176 = int_to_ptr.vmem [resolvable:$true] %s175
          %181 = dma.hbm_to_vmem [thread:$0]  %s1, 8192, %s176, [#allocation6], 256, 256, 16
        $region16: #{tpu_custom_call.1} parent=11 // pred_fallthru
          _
        // Predicated region
        $region17: #{tpu_custom_call.1} parent=11 // pred_check
          %p182 = pneg %p86
        $region18: #{tpu_custom_call.1} parent=11 // pred_check_branch
          %184 = sbr.rel (%p182) target = $region20
        $region19: #{tpu_custom_call.1} parent=11 // pred_region
          _
        $region20: #{tpu_custom_call.1} parent=11 // pred_fallthru
          _
        // Predicated region
        $region21: #{tpu_custom_call.1} parent=11 // pred_check
          %p185 = pneg %p107
        $region22: #{tpu_custom_call.1} parent=11 // pred_check_branch
          %187 = sbr.rel (%p185) target = $region24
        $region23: #{tpu_custom_call.1} parent=11 // pred_region
          %s189 = ssub.s32 16384, 16384
          %190 = vsyncadd [#allocation6], %s189
          %s191 = sshll.u32 [#allocation7], 4
          %s192 = int_to_ptr.vmem [resolvable:$true] %s191
          %197 = dma.hbm_to_vmem [thread:$0]  %s3, 16384, %s192, [#allocation6], 256, 256, 16
        $region24: #{tpu_custom_call.1} parent=11 // pred_fallthru
          _
        // Predicated region
        $region25: #{tpu_custom_call.1} parent=11 // pred_check
          %p198 = pneg %p128
        $region26: #{tpu_custom_call.1} parent=11 // pred_check_branch
          %200 = sbr.rel (%p198) target = $region28
        $region27: #{tpu_custom_call.1} parent=11 // pred_region
          _
        $region28: #{tpu_custom_call.1} parent=11 // pred_fallthru
          _
      $region12: #{tpu_custom_call.1} parent=5 // pred_fallthru
        _
      %p201 = scmp.lt.s32.totalorder %s18, 2
      // Predicated region
      $region29: #{tpu_custom_call.1} parent=5 // pred_check
        %p202 = pneg %p201
      $region30: #{tpu_custom_call.1} parent=5 // pred_check_branch
        %204 = sbr.rel (%p202) target = $region32
      $region31: #{tpu_custom_call.1} parent=5 // pred_region
        // Predicated region
        $region33: #{tpu_custom_call.1} parent=31 // pred_check
          %p205 = pneg %p38
        $region34: #{tpu_custom_call.1} parent=31 // pred_check_branch
          %207 = sbr.rel (%p205) target = $region36
        $region35: #{tpu_custom_call.1} parent=31 // pred_region
          %s208 = sand.u32 %s28, 1
          %s209 = scalar_lea.sflag [#allocation3], %s208
          %s210 = sand.u32 %s28, 1
          %s211 = smul.addr %s210, 8
          %s212 = scalar_lea.vmem [#allocation2], %s211
          %s214 = ssub.s32 128, 128
          %215 = vsyncadd %s209, %s214
          %s216 = smul.addr %s18, 128
          %s217 = scalar_lea.hbm %s0, %s216
          %s219 = sshll.u32 %s212, 4
          %s220 = int_to_ptr.vmem [resolvable:$true] %s219
          %222 = dma.hbm_to_vmem [thread:$0]  %s217, 128, %s220, %s209
        $region36: #{tpu_custom_call.1} parent=31 // pred_fallthru
          _
      $region32: #{tpu_custom_call.1} parent=5 // pred_fallthru
        _
      %p223 = scmp.le.s32.totalorder 1, %s18
      %p224 = scmp.lt.s32.totalorder %s18, 3
      %p225 = pnand %p223, %p224
      %p226 = pneg %p225
      // Predicated region
      $region37: #{tpu_custom_call.1} parent=5 // pred_check
        _
      $region38: #{tpu_custom_call.1} parent=5 // pred_check_branch
        %228 = sbr.rel (%p225) target = $region40
      $region39: #{tpu_custom_call.1} parent=5 // pred_region
        %s229 = ssub.s32 %s18, 1
        %s230 = sand.u32 %s31, 1
        %s231 = scalar_lea.sflag [#allocation3], %s230
        %s232 = sand.u32 %s31, 1
        %s233 = smul.addr %s232, 8
        %s234 = scalar_lea.vmem [#allocation2], %s233
        // Predicated region
        $region41: #{tpu_custom_call.1} parent=39 // pred_check
          %p235 = pneg %p44
        $region42: #{tpu_custom_call.1} parent=39 // pred_check_branch
          %237 = sbr.rel (%p235) target = $region44
        $region43: #{tpu_custom_call.1} parent=39 // pred_region
          %238 = dma.done %s231, 128
        $region44: #{tpu_custom_call.1} parent=39 // pred_fallthru
          _
        // Predicated region
        $region45: #{tpu_custom_call.1} parent=39 // pred_check
          %p239 = pneg %p65
        $region46: #{tpu_custom_call.1} parent=39 // pred_check_branch
          %241 = sbr.rel (%p239) target = $region48
        $region47: #{tpu_custom_call.1} parent=39 // pred_region
          %242 = dma.done [#allocation6], 8192
        $region48: #{tpu_custom_call.1} parent=39 // pred_fallthru
          _
        // Predicated region
        $region49: #{tpu_custom_call.1} parent=39 // pred_check
          %p243 = pneg %p107
        $region50: #{tpu_custom_call.1} parent=39 // pred_check_branch
          %245 = sbr.rel (%p243) target = $region52
        $region51: #{tpu_custom_call.1} parent=39 // pred_region
          %246 = dma.done [#allocation6], 16384
        $region52: #{tpu_custom_call.1} parent=39 // pred_fallthru
          _
        %s247 = sand.u32 %s31, 1
        %s248 = scalar_lea.sflag [#allocation3], %s247
        %s249 = sand.u32 %s31, 1
        %s250 = smul.addr %s249, 8
        %s251 = scalar_lea.vmem [#allocation2], %s250
        %p252 = pneg %p44
        %p253 = pneg %p41
        %p254 = pneg %p65
        %p255 = pneg %p62
        %p256 = pneg %p86
        %p257 = pneg %p83
        %p258 = pneg %p107
        %p259 = pneg %p104
        %p260 = pneg %p128
        %p261 = pneg %p125
        %p262 = pneg %p154
        %p263 = pneg %p151
        %s264 = sand.u32 %s141, 1
        %s265 = scalar_lea.sflag [#allocation4], %s264
        %s266 = sand.u32 %s141, 1
        %s267 = smul.addr %s266, 8
        %s268 = scalar_lea.vmem [#allocation8], %s267
        %v269 = vld [vmem:[%s234] sm:$0xff]
        %v271 = vrot.slane %v269, 7
        %272 = vrot.lane.b32.xlu0 %v271, 64
        %v273 = vpop.permute.xlu0 %272
        %vm275 = vcmask 1040384
        %v276 = vsel %vm275, 0.0, %v273
        %v277 = vrot.slane %v269, 1
        %vm279 = vcmask 1046528
        %v280 = vsel %vm279, %v277, 0.0
        %281 = vrot.lane.b32.xlu0 %v269, 64
        %v282 = vpop.permute.xlu0 %281
        %285 = vrot.lane.b32.xlu0 %v280, 64
        %v286 = vpop.permute.xlu0 %285
        %vm288 = vcmask 523264
        %v289 = vsel %vm288, %v276, %v282
        %v290 = vsel %vm288, %v282, %v286
        %v291 = vld [vmem:[#allocation5] sm:$0xff]
        %v292 = vld [vmem:[#allocation5 + $0x8] sm:$0xff]
        %v293 = vld [vmem:[#allocation5 + $0x10] sm:$0xff]
        %v294 = vld [vmem:[#allocation5 + $0x18] sm:$0xff]
        %v295 = vld [vmem:[#allocation5 + $0x20] sm:$0xff]
        %v296 = vld [vmem:[#allocation5 + $0x28] sm:$0xff]
        %v297 = vld [vmem:[#allocation5 + $0x30] sm:$0xff]
        %v298 = vld [vmem:[#allocation5 + $0x38] sm:$0xff]
        %v299 = vld [vmem:[#allocation5 + $0x40] sm:$0xff]
        %v300 = vld [vmem:[#allocation5 + $0x48] sm:$0xff]
        %v301 = vld [vmem:[#allocation5 + $0x50] sm:$0xff]
        %v302 = vld [vmem:[#allocation5 + $0x58] sm:$0xff]
        %v303 = vld [vmem:[#allocation5 + $0x60] sm:$0xff]
        %v304 = vld [vmem:[#allocation5 + $0x68] sm:$0xff]
        %v305 = vld [vmem:[#allocation5 + $0x70] sm:$0xff]
        %v306 = vld [vmem:[#allocation5 + $0x78] sm:$0xff]
        %v307 = vld [vmem:[#allocation5 + $0x80] sm:$0xff]
        %v308 = vld [vmem:[#allocation5 + $0x88] sm:$0xff]
        %v309 = vld [vmem:[#allocation5 + $0x90] sm:$0xff]
        %v310 = vld [vmem:[#allocation5 + $0x98] sm:$0xff]
        %v311 = vld [vmem:[#allocation5 + $0xa0] sm:$0xff]
        %v312 = vld [vmem:[#allocation5 + $0xa8] sm:$0xff]
        %v313 = vld [vmem:[#allocation5 + $0xb0] sm:$0xff]
        %v314 = vld [vmem:[#allocation5 + $0xb8] sm:$0xff]
        %v315 = vld [vmem:[#allocation5 + $0xc0] sm:$0xff]
        %v316 = vld [vmem:[#allocation5 + $0xc8] sm:$0xff]
        %v317 = vld [vmem:[#allocation5 + $0xd0] sm:$0xff]
        %v318 = vld [vmem:[#allocation5 + $0xd8] sm:$0xff]
        %v319 = vld [vmem:[#allocation5 + $0xe0] sm:$0xff]
        %v320 = vld [vmem:[#allocation5 + $0xe8] sm:$0xff]
        %v321 = vld [vmem:[#allocation5 + $0xf0] sm:$0xff]
        %v322 = vld [vmem:[#allocation5 + $0xf8] sm:$0xff]
        %v323 = vld [vmem:[#allocation5 + $0x100] sm:$0xff]
        %v324 = vld [vmem:[#allocation5 + $0x108] sm:$0xff]
        %v325 = vld [vmem:[#allocation5 + $0x110] sm:$0xff]
        %v326 = vld [vmem:[#allocation5 + $0x118] sm:$0xff]
        %v327 = vld [vmem:[#allocation5 + $0x120] sm:$0xff]
        %v328 = vld [vmem:[#allocation5 + $0x128] sm:$0xff]
        %v329 = vld [vmem:[#allocation5 + $0x130] sm:$0xff]
        %v330 = vld [vmem:[#allocation5 + $0x138] sm:$0xff]
        %v331 = vld [vmem:[#allocation5 + $0x140] sm:$0xff]
        %v332 = vld [vmem:[#allocation5 + $0x148] sm:$0xff]
        %v333 = vld [vmem:[#allocation5 + $0x150] sm:$0xff]
        %v334 = vld [vmem:[#allocation5 + $0x158] sm:$0xff]
        %v335 = vld [vmem:[#allocation5 + $0x160] sm:$0xff]
        %v336 = vld [vmem:[#allocation5 + $0x168] sm:$0xff]
        %v337 = vld [vmem:[#allocation5 + $0x170] sm:$0xff]
        %v338 = vld [vmem:[#allocation5 + $0x178] sm:$0xff]
        %v339 = vld [vmem:[#allocation5 + $0x180] sm:$0xff]
        %v340 = vld [vmem:[#allocation5 + $0x188] sm:$0xff]
        %v341 = vld [vmem:[#allocation5 + $0x190] sm:$0xff]
        %v342 = vld [vmem:[#allocation5 + $0x198] sm:$0xff]
        %v343 = vld [vmem:[#allocation5 + $0x1a0] sm:$0xff]
        %v344 = vld [vmem:[#allocation5 + $0x1a8] sm:$0xff]
        %v345 = vld [vmem:[#allocation5 + $0x1b0] sm:$0xff]
        %v346 = vld [vmem:[#allocation5 + $0x1b8] sm:$0xff]
        %v347 = vld [vmem:[#allocation5 + $0x1c0] sm:$0xff]
        %v348 = vld [vmem:[#allocation5 + $0x1c8] sm:$0xff]
        %v349 = vld [vmem:[#allocation5 + $0x1d0] sm:$0xff]
        %v350 = vld [vmem:[#allocation5 + $0x1d8] sm:$0xff]
        %v351 = vld [vmem:[#allocation5 + $0x1e0] sm:$0xff]
        %v352 = vld [vmem:[#allocation5 + $0x1e8] sm:$0xff]
        %v353 = vld [vmem:[#allocation5 + $0x1f0] sm:$0xff]
        %v354 = vld [vmem:[#allocation5 + $0x1f8] sm:$0xff]
        %v355 = vld [vmem:[%s2] sm:$0x3]
        %v357 = vlaneseq
        %v358 = vshrl.u32 %v357, 7
        %v359 = vsub.s32 0, %v358
        %v360 = vrot.slane %v355, %v359
        %v361 = vlaneseq
        %v362 = vshrl.u32 %v361, 7
        %v363 = vsub.s32 1, %v362
        %v364 = vrot.slane %v355, %v363
        %367 = vmatprep.subr.mxu0 %v322
        %368 = vmatpush1.msra.mxu0 %v321
        %369 = vmatprep.subr.mxu0 %v320
        %370 = vmatpush1.msra.mxu0 %v319
        %371 = vmatprep.subr.mxu0 %v318
        %372 = vmatpush1.msra.mxu0 %v317
        %373 = vmatprep.subr.mxu0 %v316
        %374 = vmatpush1.msra.mxu0 %v315
        %375 = vmatprep.subr.mxu0 %v314
        %376 = vmatpush1.msra.mxu0 %v313
        %377 = vmatprep.subr.mxu0 %v312
        %378 = vmatpush1.msra.mxu0 %v311
        %379 = vmatprep.subr.mxu0 %v310
        %380 = vmatpush1.msra.mxu0 %v309
        %381 = vmatprep.subr.mxu0 %v308
        %382 = vmatpush1.msra.mxu0 %v307
        %383 = vmatprep.subr.mxu0 %v306
        %384 = vmatpush1.msra.mxu0 %v305
        %385 = vmatprep.subr.mxu0 %v304
        %386 = vmatpush1.msra.mxu0 %v303
        %387 = vmatprep.subr.mxu0 %v302
        %388 = vmatpush1.msra.mxu0 %v301
        %389 = vmatprep.subr.mxu0 %v300
        %390 = vmatpush1.msra.mxu0 %v299
        %391 = vmatprep.subr.mxu0 %v298
        %392 = vmatpush1.msra.mxu0 %v297
        %393 = vmatprep.subr.mxu0 %v296
        %394 = vmatpush1.msra.mxu0 %v295
        %395 = vmatprep.subr.mxu0 %v294
        %396 = vmatpush1.msra.mxu0 %v293
        %397 = vmatprep.subr.mxu0 %v292
        %398 = vmatpush1.msra.mxu0 %v291
        %399 = vmatprep.subr.mxu0 %v354
        %400 = vmatpush2.msra.mxu0 %v353
        %401 = vmatprep.subr.mxu0 %v352
        %402 = vmatpush2.msra.mxu0 %v351
        %403 = vmatprep.subr.mxu0 %v350
        %404 = vmatpush2.msra.mxu0 %v349
        %405 = vmatprep.subr.mxu0 %v348
        %406 = vmatpush2.msra.mxu0 %v347
        %407 = vmatprep.subr.mxu0 %v346
        %408 = vmatpush2.msra.mxu0 %v345
        %409 = vmatprep.subr.mxu0 %v344
        %410 = vmatpush2.msra.mxu0 %v343
        %411 = vmatprep.subr.mxu0 %v342
        %412 = vmatpush2.msra.mxu0 %v341
        %413 = vmatprep.subr.mxu0 %v340
        %414 = vmatpush2.msra.mxu0 %v339
        %415 = vmatprep.subr.mxu0 %v338
        %416 = vmatpush2.msra.mxu0 %v337
        %417 = vmatprep.subr.mxu0 %v336
        %418 = vmatpush2.msra.mxu0 %v335
        %419 = vmatprep.subr.mxu0 %v334
        %420 = vmatpush2.msra.mxu0 %v333
        %421 = vmatprep.subr.mxu0 %v332
        %422 = vmatpush2.msra.mxu0 %v331
        %423 = vmatprep.subr.mxu0 %v330
        %424 = vmatpush2.msra.mxu0 %v329
        %425 = vmatprep.subr.mxu0 %v328
        %426 = vmatpush2.msra.mxu0 %v327
        %427 = vmatprep.subr.mxu0 %v326
        %428 = vmatpush2.msra.mxu0 %v325
        %429 = vmatprep.subr.mxu0 %v324
        %430 = vmatpush2.msra.mxu0 %v323
        %431 = vmatprep.mubr.f32.mxu0 %v290
        %432 = vmatmul.mubr.f32.gmra.mxu0 %v289
        %v433 = vpop.f32.mrf.mxu0
        %v434 = vadd.f32 %v360, %v433
        %v435 = vpop.f32.mrf.mxu0
        %v436 = vadd.f32 %v364, %v435
        %437 = vdwg.mxu0
        %v439 = vrot.slane %v436, 7
        %v441 = vsel %vm275, 0.0, %v439
        %v443 = vrot.slane %v434, 1
        %v445 = vsel %vm279, %v443, 0.0
        %v446 = vld [vmem:[#allocation7] sm:$0xff]
        %v447 = vld [vmem:[#allocation7 + $0x8] sm:$0xff]
        %v448 = vld [vmem:[#allocation7 + $0x10] sm:$0xff]
        %v449 = vld [vmem:[#allocation7 + $0x18] sm:$0xff]
        %v450 = vld [vmem:[#allocation7 + $0x20] sm:$0xff]
        %v451 = vld [vmem:[#allocation7 + $0x28] sm:$0xff]
        %v452 = vld [vmem:[#allocation7 + $0x30] sm:$0xff]
        %v453 = vld [vmem:[#allocation7 + $0x38] sm:$0xff]
        %v454 = vld [vmem:[#allocation7 + $0x40] sm:$0xff]
        %v455 = vld [vmem:[#allocation7 + $0x48] sm:$0xff]
        %v456 = vld [vmem:[#allocation7 + $0x50] sm:$0xff]
        %v457 = vld [vmem:[#allocation7 + $0x58] sm:$0xff]
        %v458 = vld [vmem:[#allocation7 + $0x60] sm:$0xff]
        %v459 = vld [vmem:[#allocation7 + $0x68] sm:$0xff]
        %v460 = vld [vmem:[#allocation7 + $0x70] sm:$0xff]
        %v461 = vld [vmem:[#allocation7 + $0x78] sm:$0xff]
        %v462 = vld [vmem:[#allocation7 + $0x80] sm:$0xff]
        %v463 = vld [vmem:[#allocation7 + $0x88] sm:$0xff]
        %v464 = vld [vmem:[#allocation7 + $0x90] sm:$0xff]
        %v465 = vld [vmem:[#allocation7 + $0x98] sm:$0xff]
        %v466 = vld [vmem:[#allocation7 + $0xa0] sm:$0xff]
        %v467 = vld [vmem:[#allocation7 + $0xa8] sm:$0xff]
        %v468 = vld [vmem:[#allocation7 + $0xb0] sm:$0xff]
        %v469 = vld [vmem:[#allocation7 + $0xb8] sm:$0xff]
        %v470 = vld [vmem:[#allocation7 + $0xc0] sm:$0xff]
        %v471 = vld [vmem:[#allocation7 + $0xc8] sm:$0xff]
        %v472 = vld [vmem:[#allocation7 + $0xd0] sm:$0xff]
        %v473 = vld [vmem:[#allocation7 + $0xd8] sm:$0xff]
        %v474 = vld [vmem:[#allocation7 + $0xe0] sm:$0xff]
        %v475 = vld [vmem:[#allocation7 + $0xe8] sm:$0xff]
        %v476 = vld [vmem:[#allocation7 + $0xf0] sm:$0xff]
        %v477 = vld [vmem:[#allocation7 + $0xf8] sm:$0xff]
        %v478 = vld [vmem:[#allocation7 + $0x100] sm:$0xff]
        %v479 = vld [vmem:[#allocation7 + $0x108] sm:$0xff]
        %v480 = vld [vmem:[#allocation7 + $0x110] sm:$0xff]
        %v481 = vld [vmem:[#allocation7 + $0x118] sm:$0xff]
        %v482 = vld [vmem:[#allocation7 + $0x120] sm:$0xff]
        %v483 = vld [vmem:[#allocation7 + $0x128] sm:$0xff]
        %v484 = vld [vmem:[#allocation7 + $0x130] sm:$0xff]
        %v485 = vld [vmem:[#allocation7 + $0x138] sm:$0xff]
        %v486 = vld [vmem:[#allocation7 + $0x140] sm:$0xff]
        %v487 = vld [vmem:[#allocation7 + $0x148] sm:$0xff]
        %v488 = vld [vmem:[#allocation7 + $0x150] sm:$0xff]
        %v489 = vld [vmem:[#allocation7 + $0x158] sm:$0xff]
        %v490 = vld [vmem:[#allocation7 + $0x160] sm:$0xff]
        %v491 = vld [vmem:[#allocation7 + $0x168] sm:$0xff]
        %v492 = vld [vmem:[#allocation7 + $0x170] sm:$0xff]
        %v493 = vld [vmem:[#allocation7 + $0x178] sm:$0xff]
        %v494 = vld [vmem:[#allocation7 + $0x180] sm:$0xff]
        %v495 = vld [vmem:[#allocation7 + $0x188] sm:$0xff]
        %v496 = vld [vmem:[#allocation7 + $0x190] sm:$0xff]
        %v497 = vld [vmem:[#allocation7 + $0x198] sm:$0xff]
        %v498 = vld [vmem:[#allocation7 + $0x1a0] sm:$0xff]
        %v499 = vld [vmem:[#allocation7 + $0x1a8] sm:$0xff]
        %v500 = vld [vmem:[#allocation7 + $0x1b0] sm:$0xff]
        %v501 = vld [vmem:[#allocation7 + $0x1b8] sm:$0xff]
        %v502 = vld [vmem:[#allocation7 + $0x1c0] sm:$0xff]
        %v503 = vld [vmem:[#allocation7 + $0x1c8] sm:$0xff]
        %v504 = vld [vmem:[#allocation7 + $0x1d0] sm:$0xff]
        %v505 = vld [vmem:[#allocation7 + $0x1d8] sm:$0xff]
        %v506 = vld [vmem:[#allocation7 + $0x1e0] sm:$0xff]
        %v507 = vld [vmem:[#allocation7 + $0x1e8] sm:$0xff]
        %v508 = vld [vmem:[#allocation7 + $0x1f0] sm:$0xff]
        %v509 = vld [vmem:[#allocation7 + $0x1f8] sm:$0xff]
        %v510 = vld [vmem:[#allocation7 + $0x200] sm:$0xff]
        %v511 = vld [vmem:[#allocation7 + $0x208] sm:$0xff]
        %v512 = vld [vmem:[#allocation7 + $0x210] sm:$0xff]
        %v513 = vld [vmem:[#allocation7 + $0x218] sm:$0xff]
        %v514 = vld [vmem:[#allocation7 + $0x220] sm:$0xff]
        %v515 = vld [vmem:[#allocation7 + $0x228] sm:$0xff]
        %v516 = vld [vmem:[#allocation7 + $0x230] sm:$0xff]
        %v517 = vld [vmem:[#allocation7 + $0x238] sm:$0xff]
        %v518 = vld [vmem:[#allocation7 + $0x240] sm:$0xff]
        %v519 = vld [vmem:[#allocation7 + $0x248] sm:$0xff]
        %v520 = vld [vmem:[#allocation7 + $0x250] sm:$0xff]
        %v521 = vld [vmem:[#allocation7 + $0x258] sm:$0xff]
        %v522 = vld [vmem:[#allocation7 + $0x260] sm:$0xff]
        %v523 = vld [vmem:[#allocation7 + $0x268] sm:$0xff]
        %v524 = vld [vmem:[#allocation7 + $0x270] sm:$0xff]
        %v525 = vld [vmem:[#allocation7 + $0x278] sm:$0xff]
        %v526 = vld [vmem:[#allocation7 + $0x280] sm:$0xff]
        %v527 = vld [vmem:[#allocation7 + $0x288] sm:$0xff]
        %v528 = vld [vmem:[#allocation7 + $0x290] sm:$0xff]
        %v529 = vld [vmem:[#allocation7 + $0x298] sm:$0xff]
        %v530 = vld [vmem:[#allocation7 + $0x2a0] sm:$0xff]
        %v531 = vld [vmem:[#allocation7 + $0x2a8] sm:$0xff]
        %v532 = vld [vmem:[#allocation7 + $0x2b0] sm:$0xff]
        %v533 = vld [vmem:[#allocation7 + $0x2b8] sm:$0xff]
        %v534 = vld [vmem:[#allocation7 + $0x2c0] sm:$0xff]
        %v535 = vld [vmem:[#allocation7 + $0x2c8] sm:$0xff]
        %v536 = vld [vmem:[#allocation7 + $0x2d0] sm:$0xff]
        %v537 = vld [vmem:[#allocation7 + $0x2d8] sm:$0xff]
        %v538 = vld [vmem:[#allocation7 + $0x2e0] sm:$0xff]
        %v539 = vld [vmem:[#allocation7 + $0x2e8] sm:$0xff]
        %v540 = vld [vmem:[#allocation7 + $0x2f0] sm:$0xff]
        %v541 = vld [vmem:[#allocation7 + $0x2f8] sm:$0xff]
        %v542 = vld [vmem:[#allocation7 + $0x300] sm:$0xff]
        %v543 = vld [vmem:[#allocation7 + $0x308] sm:$0xff]
        %v544 = vld [vmem:[#allocation7 + $0x310] sm:$0xff]
        %v545 = vld [vmem:[#allocation7 + $0x318] sm:$0xff]
        %v546 = vld [vmem:[#allocation7 + $0x320] sm:$0xff]
        %v547 = vld [vmem:[#allocation7 + $0x328] sm:$0xff]
        %v548 = vld [vmem:[#allocation7 + $0x330] sm:$0xff]
        %v549 = vld [vmem:[#allocation7 + $0x338] sm:$0xff]
        %v550 = vld [vmem:[#allocation7 + $0x340] sm:$0xff]
        %v551 = vld [vmem:[#allocation7 + $0x348] sm:$0xff]
        %v552 = vld [vmem:[#allocation7 + $0x350] sm:$0xff]
        %v553 = vld [vmem:[#allocation7 + $0x358] sm:$0xff]
        %v554 = vld [vmem:[#allocation7 + $0x360] sm:$0xff]
        %v555 = vld [vmem:[#allocation7 + $0x368] sm:$0xff]
        %v556 = vld [vmem:[#allocation7 + $0x370] sm:$0xff]
        %v557 = vld [vmem:[#allocation7 + $0x378] sm:$0xff]
        %v558 = vld [vmem:[#allocation7 + $0x380] sm:$0xff]
        %v559 = vld [vmem:[#allocation7 + $0x388] sm:$0xff]
        %v560 = vld [vmem:[#allocation7 + $0x390] sm:$0xff]
        %v561 = vld [vmem:[#allocation7 + $0x398] sm:$0xff]
        %v562 = vld [vmem:[#allocation7 + $0x3a0] sm:$0xff]
        %v563 = vld [vmem:[#allocation7 + $0x3a8] sm:$0xff]
        %v564 = vld [vmem:[#allocation7 + $0x3b0] sm:$0xff]
        %v565 = vld [vmem:[#allocation7 + $0x3b8] sm:$0xff]
        %v566 = vld [vmem:[#allocation7 + $0x3c0] sm:$0xff]
        %v567 = vld [vmem:[#allocation7 + $0x3c8] sm:$0xff]
        %v568 = vld [vmem:[#allocation7 + $0x3d0] sm:$0xff]
        %v569 = vld [vmem:[#allocation7 + $0x3d8] sm:$0xff]
        %v570 = vld [vmem:[#allocation7 + $0x3e0] sm:$0xff]
        %v571 = vld [vmem:[#allocation7 + $0x3e8] sm:$0xff]
        %v572 = vld [vmem:[#allocation7 + $0x3f0] sm:$0xff]
        %v573 = vld [vmem:[#allocation7 + $0x3f8] sm:$0xff]
        %v574 = vld [vmem:[%s4] sm:$0x3]
        %v576 = vlaneseq
        %v577 = vshrl.u32 %v576, 7
        %v578 = vsub.s32 0, %v577
        %v579 = vrot.slane %v574, %v578
        %v580 = vlaneseq
        %v581 = vshrl.u32 %v580, 7
        %v582 = vsub.s32 1, %v581
        %v583 = vrot.slane %v574, %v582
        %586 = vmatprep.subr.mxu0 %v477
        %587 = vmatpush1.msra.mxu0 %v476
        %588 = vmatprep.subr.mxu0 %v475
        %589 = vmatpush1.msra.mxu0 %v474
        %590 = vmatprep.subr.mxu0 %v473
        %591 = vmatpush1.msra.mxu0 %v472
        %592 = vmatprep.subr.mxu0 %v471
        %593 = vmatpush1.msra.mxu0 %v470
        %594 = vmatprep.subr.mxu0 %v469
        %595 = vmatpush1.msra.mxu0 %v468
        %596 = vmatprep.subr.mxu0 %v467
        %597 = vmatpush1.msra.mxu0 %v466
        %598 = vmatprep.subr.mxu0 %v465
        %599 = vmatpush1.msra.mxu0 %v464
        %600 = vmatprep.subr.mxu0 %v463
        %601 = vmatpush1.msra.mxu0 %v462
        %602 = vmatprep.subr.mxu0 %v461
        %603 = vmatpush1.msra.mxu0 %v460
        %604 = vmatprep.subr.mxu0 %v459
        %605 = vmatpush1.msra.mxu0 %v458
        %606 = vmatprep.subr.mxu0 %v457
        %607 = vmatpush1.msra.mxu0 %v456
        %608 = vmatprep.subr.mxu0 %v455
        %609 = vmatpush1.msra.mxu0 %v454
        %610 = vmatprep.subr.mxu0 %v453
        %611 = vmatpush1.msra.mxu0 %v452
        %612 = vmatprep.subr.mxu0 %v451
        %613 = vmatpush1.msra.mxu0 %v450
        %614 = vmatprep.subr.mxu0 %v449
        %615 = vmatpush1.msra.mxu0 %v448
        %616 = vmatprep.subr.mxu0 %v447
        %617 = vmatpush1.msra.mxu0 %v446
        %618 = vmatprep.subr.mxu0 %v509
        %619 = vmatpush2.msra.mxu0 %v508
        %620 = vmatprep.subr.mxu0 %v507
        %621 = vmatpush2.msra.mxu0 %v506
        %622 = vmatprep.subr.mxu0 %v505
        %623 = vmatpush2.msra.mxu0 %v504
        %624 = vmatprep.subr.mxu0 %v503
        %625 = vmatpush2.msra.mxu0 %v502
        %626 = vmatprep.subr.mxu0 %v501
        %627 = vmatpush2.msra.mxu0 %v500
        %628 = vmatprep.subr.mxu0 %v499
        %629 = vmatpush2.msra.mxu0 %v498
        %630 = vmatprep.subr.mxu0 %v497
        %631 = vmatpush2.msra.mxu0 %v496
        %632 = vmatprep.subr.mxu0 %v495
        %633 = vmatpush2.msra.mxu0 %v494
        %634 = vmatprep.subr.mxu0 %v493
        %635 = vmatpush2.msra.mxu0 %v492
        %636 = vmatprep.subr.mxu0 %v491
        %637 = vmatpush2.msra.mxu0 %v490
        %638 = vmatprep.subr.mxu0 %v489
        %639 = vmatpush2.msra.mxu0 %v488
        %640 = vmatprep.subr.mxu0 %v487
        %641 = vmatpush2.msra.mxu0 %v486
        %642 = vmatprep.subr.mxu0 %v485
        %643 = vmatpush2.msra.mxu0 %v484
        %644 = vmatprep.subr.mxu0 %v483
        %645 = vmatpush2.msra.mxu0 %v482
        %646 = vmatprep.subr.mxu0 %v481
        %647 = vmatpush2.msra.mxu0 %v480
        %648 = vmatprep.subr.mxu0 %v479
        %649 = vmatpush2.msra.mxu0 %v478
        %650 = vmatprep.mubr.f32.mxu0 %v434
        %651 = vmatmul.mubr.f32.gmra.mxu0 %v441
        %v652 = vpop.f32.mrf.mxu0
        %v653 = vadd.f32 %v579, %v652
        %v654 = vpop.f32.mrf.mxu0
        %v655 = vadd.f32 %v583, %v654
        %656 = vdwg.mxu0
        %657 = vmatprep.subr.mxu0 %v541
        %658 = vmatpush1.msra.mxu0 %v540
        %659 = vmatprep.subr.mxu0 %v539
        %660 = vmatpush1.msra.mxu0 %v538
        %661 = vmatprep.subr.mxu0 %v537
        %662 = vmatpush1.msra.mxu0 %v536
        %663 = vmatprep.subr.mxu0 %v535
        %664 = vmatpush1.msra.mxu0 %v534
        %665 = vmatprep.subr.mxu0 %v533
        %666 = vmatpush1.msra.mxu0 %v532
        %667 = vmatprep.subr.mxu0 %v531
        %668 = vmatpush1.msra.mxu0 %v530
        %669 = vmatprep.subr.mxu0 %v529
        %670 = vmatpush1.msra.mxu0 %v528
        %671 = vmatprep.subr.mxu0 %v527
        %672 = vmatpush1.msra.mxu0 %v526
        %673 = vmatprep.subr.mxu0 %v525
        %674 = vmatpush1.msra.mxu0 %v524
        %675 = vmatprep.subr.mxu0 %v523
        %676 = vmatpush1.msra.mxu0 %v522
        %677 = vmatprep.subr.mxu0 %v521
        %678 = vmatpush1.msra.mxu0 %v520
        %679 = vmatprep.subr.mxu0 %v519
        %680 = vmatpush1.msra.mxu0 %v518
        %681 = vmatprep.subr.mxu0 %v517
        %682 = vmatpush1.msra.mxu0 %v516
        %683 = vmatprep.subr.mxu0 %v515
        %684 = vmatpush1.msra.mxu0 %v514
        %685 = vmatprep.subr.mxu0 %v513
        %686 = vmatpush1.msra.mxu0 %v512
        %687 = vmatprep.subr.mxu0 %v511
        %688 = vmatpush1.msra.mxu0 %v510
        %689 = vmatprep.subr.mxu0 %v573
        %690 = vmatpush2.msra.mxu0 %v572
        %691 = vmatprep.subr.mxu0 %v571
        %692 = vmatpush2.msra.mxu0 %v570
        %693 = vmatprep.subr.mxu0 %v569
        %694 = vmatpush2.msra.mxu0 %v568
        %695 = vmatprep.subr.mxu0 %v567
        %696 = vmatpush2.msra.mxu0 %v566
        %697 = vmatprep.subr.mxu0 %v565
        %698 = vmatpush2.msra.mxu0 %v564
        %699 = vmatprep.subr.mxu0 %v563
        %700 = vmatpush2.msra.mxu0 %v562
        %701 = vmatprep.subr.mxu0 %v561
        %702 = vmatpush2.msra.mxu0 %v560
        %703 = vmatprep.subr.mxu0 %v559
        %704 = vmatpush2.msra.mxu0 %v558
        %705 = vmatprep.subr.mxu0 %v557
        %706 = vmatpush2.msra.mxu0 %v556
        %707 = vmatprep.subr.mxu0 %v555
        %708 = vmatpush2.msra.mxu0 %v554
        %709 = vmatprep.subr.mxu0 %v553
        %710 = vmatpush2.msra.mxu0 %v552
        %711 = vmatprep.subr.mxu0 %v551
        %712 = vmatpush2.msra.mxu0 %v550
        %713 = vmatprep.subr.mxu0 %v549
        %714 = vmatpush2.msra.mxu0 %v548
        %715 = vmatprep.subr.mxu0 %v547
        %716 = vmatpush2.msra.mxu0 %v546
        %717 = vmatprep.subr.mxu0 %v545
        %718 = vmatpush2.msra.mxu0 %v544
        %719 = vmatprep.subr.mxu0 %v543
        %720 = vmatpush2.msra.mxu0 %v542
        %721 = vmatprep.mubr.f32.mxu0 %v445
        %722 = vmatmul.mubr.f32.gmra.mxu0 %v436
        %v723 = vpop.f32.mrf.mxu0
        %v724 = vadd.f32 %v653, %v723
        %v725 = vpop.f32.mrf.mxu0
        %v726 = vadd.f32 %v655, %v725
        %727 = vdwg.mxu0
        %v728 = vmax.f32 %v724, 0.0
        %v729 = vmax.f32 %v726, 0.0
        %731 = vrot.lane.b32.xlu0 %v728, 64
        %v732 = vpop.permute.xlu0 %731
        %v734 = vmax.f32 %v728, %v732
        %736 = vrot.lane.b32.xlu0 %v729, 64
        %v737 = vpop.permute.xlu0 %736
        %v739 = vmax.f32 %v729, %v737
        %v740 = vmax.f32 %v734, %v739
        %741 = vst.msk [vmem:[%s268] sm:$0xff] %vm288, %v740
        %s742 = sand.u32 %s141, 1
        %s743 = scalar_lea.sflag [#allocation4], %s742
        %s744 = sand.u32 %s141, 1
        %s745 = smul.addr %s744, 8
        %s746 = scalar_lea.vmem [#allocation8], %s745
        // Predicated region
        $region53: #{tpu_custom_call.1} parent=39 // pred_check
          %p747 = pneg %p151
        $region54: #{tpu_custom_call.1} parent=39 // pred_check_branch
          %749 = sbr.rel (%p747) target = $region56
        $region55: #{tpu_custom_call.1} parent=39 // pred_region
          %s751 = ssub.s32 128, 128
          %752 = vsyncadd %s743, %s751
          %s753 = smul.addr %s23, 128
          %s754 = scalar_lea.hbm %s5, %s753
          %s756 = sshll.u32 %s746, 4
          %s757 = int_to_ptr.vmem [resolvable:$true] %s756
          %759 = dma.vmem_to_hbm [thread:$0]  %s757, 128, %s754, %s743
        $region56: #{tpu_custom_call.1} parent=39 // pred_fallthru
          _
      $region40: #{tpu_custom_call.1} parent=5 // pred_fallthru
        _
      %p760 = scmp.le.s32.totalorder 2, %s18
      // Predicated region
      $region57: #{tpu_custom_call.1} parent=5 // pred_check
        %p761 = pneg %p760
      $region58: #{tpu_custom_call.1} parent=5 // pred_check_branch
        %763 = sbr.rel (%p761) target = $region60
      $region59: #{tpu_custom_call.1} parent=5 // pred_region
        %s764 = ssub.s32 %s18, 2
        // Predicated region
        $region61: #{tpu_custom_call.1} parent=59 // pred_check
          %p765 = pneg %p157
        $region62: #{tpu_custom_call.1} parent=59 // pred_check_branch
          %767 = sbr.rel (%p765) target = $region64
        $region63: #{tpu_custom_call.1} parent=59 // pred_region
          %s768 = sand.u32 %s142, 1
          %s769 = scalar_lea.sflag [#allocation4], %s768
          %s770 = sand.u32 %s142, 1
          %s771 = smul.addr %s770, 8
          %s772 = scalar_lea.vmem [#allocation8], %s771
          %773 = dma.done %s769, 128
        $region64: #{tpu_custom_call.1} parent=59 // pred_fallthru
          _
      $region60: #{tpu_custom_call.1} parent=5 // pred_fallthru
        _
    $region6: #{tpu_custom_call.1} parent=1 // loop_footer
      %s22 = sadd.s32 1, %s18
    $region7: #{tpu_custom_call.1} parent=1 // loop_footer_branch
      %17 = sbr.rel target = $region3
    $region8: #{tpu_custom_call.1} parent=1 // loop_exit
      _
    %774 = vsyncpa [#allocation3], 1
    %s775 = scalar_lea.sflag [#allocation3], 1
    %776 = vsyncpa %s775, 1
    %777 = vsyncpa [#allocation6], 1
    %778 = vsyncpa [#allocation4], 1
    %s779 = scalar_lea.sflag [#allocation4], 1
    %780 = vsyncpa %s779, 1

</llo_original>
